<compile_context>
chip_gen: v5e
topology: v5e:2x2
jax: 0.10.0
libtpu: 0.0.40
codegen_flags: <defaults>
</compile_context>

<pallas_src>
import functools

import jax
import jax.numpy as jnp
import numpy as np
from jax.experimental import pallas as pl
from jax.experimental.pallas import tpu as pltpu


def _layernorm(x, gamma, beta, eps=1e-6):
    mean = jnp.mean(x, axis=-1, keepdims=True)
    var = jnp.mean((x - mean) ** 2, axis=-1, keepdims=True)
    return (x - mean) * jax.lax.rsqrt(var + eps) * gamma + beta


def _silu(x):
    return x * jax.nn.sigmoid(x)


def simple_mlp_kernel(x_ref,
                      wd_ref, wu_ref, wo_ref,   # w_down (D,B), folded w_up (B,D), w_out col block (D,tn)
                      vb_ref, vd_ref, bo_ref,   # packed (8,B)/(8,D) vectors f32, b_out col block (1,tn)
                      o_ref, u_ref, *, matmul_dtype):
    # j == 0: run down -> folded(linear_in+up) -> LN/SiLU once per row tile and park
    # the activation in the per-core VMEM scratch u_ref; every j block reuses it.
    @pl.when(pl.program_id(1) == 0)
    def _():
        b_down, g_down, bt_down = (vb_ref[i:i + 1, :] for i in range(3))
        b_up, g_up, bt_up = (vd_ref[i:i + 1, :] for i in range(3))

        x = x_ref[...].astype(matmul_dtype)
        # down: Linear(D -> B) -> LayerNorm(eps=1e-6) -> SiLU   (f32 accumulate / LN / SiLU)
        h = jnp.dot(x, wd_ref[...], preferred_element_type=jnp.float32) + b_down
        h = _silu(_layernorm(h, g_down, bt_down))
        # linear_in folded into up (exact in f32: no nonlinearity between them):
        #   w_up' = w_in @ w_up, b_up' = b_in @ w_up + b_up
        u = jnp.dot(h.astype(matmul_dtype), wu_ref[...],
                    preferred_element_type=jnp.float32) + b_up
        u = _silu(_layernorm(u, g_up, bt_up))
        u_ref[...] = u.astype(matmul_dtype)

    # linear_out streamed over output-column blocks (faithful to zero_module weights).
    y = jnp.dot(u_ref[...], wo_ref[...],
                preferred_element_type=jnp.float32) + bo_ref[...]
    o_ref[...] = y.astype(o_ref.dtype)


def prepare_params(params, matmul_dtype=jnp.bfloat16):
    """One-time prep (per parameter update): fold linear_in into up, cast weights to
    bf16, pack the small per-feature vectors into (8, N) slabs."""
    D, B = params["w_down"].shape
    w_up_folded = params["w_in"] @ params["w_up"]                    # (B, D), f32
    b_up_folded = params["b_in"] @ params["w_up"] + params["b_up"]   # (1, D), f32
    vecs_b = jnp.concatenate(
        [params["b_down"], params["g_down"], params["beta_down"],
         jnp.zeros((5, B), jnp.float32)], axis=0)                    # (8, B)
    vecs_d = jnp.concatenate(
        [b_up_folded, params["g_up"], params["beta_up"],
         jnp.zeros((5, D), jnp.float32)], axis=0)                    # (8, D)
    return dict(
        w_down=params["w_down"].astype(matmul_dtype),
        w_up=w_up_folded.astype(matmul_dtype),
        w_out=params["w_out"].astype(matmul_dtype),
        vecs_b=vecs_b, vecs_d=vecs_d,
        b_out=params["b_out"].astype(jnp.float32),
        matmul_dtype=matmul_dtype,
    )


def _physical_vmem_bytes():
    try:
        cap = getattr(pltpu.get_tpu_info(), "vmem_capacity_bytes", None)
        if cap:
            return int(cap)
    except Exception:
        pass
    return 64 * 1024 * 1024          # conservative: v7x per-TensorCore VMEM


def _vmem_estimate(tm, tn, D, B, wbytes, xbytes, obytes):
    return int(
        2 * D * B * wbytes           # w_down + folded w_up (Buffered(1), resident)
        + 2 * D * tn * wbytes        # streamed w_out column blocks, double-buffered
        + 8 * (B + D) * 4 + 4 * tn * 4
        + 2 * tm * D * xbytes        # x tiles, double-buffered
        + 2 * tm * tn * obytes       # out tiles, double-buffered
        + tm * D * wbytes            # u scratch (bf16)
        + tm * (B + 2 * D) * 4       # in-kernel f32 temporaries headroom
    )


def simple_mlp_forward(x2d, prepared):
    M, D = x2d.shape
    B = prepared["w_down"].shape[1]
    matmul_dtype = prepared["matmul_dtype"]
    wbytes = np.dtype(matmul_dtype).itemsize
    xbytes = np.dtype(x2d.dtype).itemsize
    obytes = xbytes

    phys = _physical_vmem_bytes()
    budget = int(0.75 * phys)        # ~48 MiB on v7x, ~96 MiB on v5e/v6e

    # Row tile: aim for >= ~8 m-steps (so both v7x TCs pipeline several steps),
    # multiple of 8 sublanes; larger cap on 128 MiB parts with small D (v5e/v6e).
    tm_cap = 1024 if (phys >= (100 << 20) and D <= 1024) else 512
    tm = int(min(tm_cap, max(8, pl.cdiv(pl.cdiv(M, 8), 8) * 8)))
    # Output-column tile for streaming w_out (lane-dense, multiple of 128).
    tn = D if D <= 512 else 512

    # Shrink tiles until the working set fits the per-generation VMEM budget.
    while _vmem_estimate(tm, tn, D, B, wbytes, xbytes, obytes) > budget and tm > 64:
        tm = max(64, tm // 2)
    while _vmem_estimate(tm, tn, D, B, wbytes, xbytes, obytes) > budget and tn > 128:
        tn = max(128, ((tn // 2) + 127) // 128 * 128)
    est = _vmem_estimate(tm, tn, D, B, wbytes, xbytes, obytes)
    vmem_limit = int(min(budget, max(32 * 1024 * 1024, int(1.3 * est))))

    grid = (pl.cdiv(M, tm), pl.cdiv(D, tn))

    def const_spec(shape):  # grid-invariant block, single-buffered (DMA'd once)
        return pl.BlockSpec(shape, lambda i, j: (0, 0), pipeline_mode=pl.Buffered(1))

    out = pl.pallas_call(
        functools.partial(simple_mlp_kernel, matmul_dtype=matmul_dtype),
        out_shape=jax.ShapeDtypeStruct((M, D), x2d.dtype),
        grid_spec=pltpu.PrefetchScalarGridSpec(
            num_scalar_prefetch=0,
            grid=grid,
            in_specs=[
                pl.BlockSpec((tm, D), lambda i, j: (i, 0)),   # x row tile (re-fetched only when i changes)
                const_spec((D, B)),                           # w_down
                const_spec((B, D)),                           # folded w_in @ w_up
                pl.BlockSpec((D, tn), lambda i, j: (0, j)),   # w_out column block (streamed)
                const_spec((8, B)),                           # packed b_down / gamma / beta
                const_spec((8, D)),                           # packed b_up' / gamma / beta
                pl.BlockSpec((1, tn), lambda i, j: (0, j)),   # b_out column block
            ],
            out_specs=pl.BlockSpec((tm, tn), lambda i, j: (i, j)),
            scratch_shapes=[pltpu.VMEM((tm, D), matmul_dtype)],
        ),
        compiler_params=pltpu.CompilerParams(
            dimension_semantics=("parallel", "arbitrary"),
            vmem_limit_bytes=vmem_limit),
    )(x2d, prepared["w_down"], prepared["w_up"], prepared["w_out"],
      prepared["vecs_b"], prepared["vecs_d"], prepared["b_out"])
    return out


def simple_mlp_ref(x2d, p):
    h = x2d @ p["w_down"] + p["b_down"]
    h = _silu(_layernorm(h, p["g_down"], p["beta_down"]))
    h = h @ p["w_in"] + p["b_in"]
    u = h @ p["w_up"] + p["b_up"]
    u = _silu(_layernorm(u, p["g_up"], p["beta_up"]))
    return u @ p["w_out"] + p["b_out"]


def init_params(key, input_dim, bottleneck_ratio=16.0):
    D = input_dim
    B = int(D // bottleneck_ratio)
    ks = jax.random.split(key, 3)

    def linear(k, fan_in, fan_out):
        # PyTorch-style uniform(-1/sqrt(fan_in), 1/sqrt(fan_in)) init, (in, out) layout
        bound = 1.0 / np.sqrt(fan_in)
        kw, kb = jax.random.split(k)
        w = jax.random.uniform(kw, (fan_in, fan_out), jnp.float32, -bound, bound)
        b = jax.random.uniform(kb, (1, fan_out), jnp.float32, -bound, bound)
        return w, b

    w_down, b_down = linear(ks[0], D, B)
    w_in, b_in = linear(ks[1], B, B)
    w_up, b_up = linear(ks[2], B, D)
    # zero_module(linear_out)
    w_out = jnp.zeros((D, D), jnp.float32)
    b_out = jnp.zeros((1, D), jnp.float32)

    return dict(
        w_down=w_down, b_down=b_down,
        g_down=jnp.ones((1, B), jnp.float32), beta_down=jnp.zeros((1, B), jnp.float32),
        w_in=w_in, b_in=b_in,
        w_up=w_up, b_up=b_up,
        g_up=jnp.ones((1, D), jnp.float32), beta_up=jnp.zeros((1, D), jnp.float32),
        w_out=w_out, b_out=b_out,
    )


if __name__ == "__main__":
    key = jax.random.PRNGKey(0)
    kx, kp, kw = jax.random.split(key, 3)

    batch, seq, input_dim = 2, 8, 128   # bottle_dim = 128 // 16 = 8
    x = jax.random.normal(kx, (batch, seq, input_dim), jnp.float32)
    params = init_params(kp, input_dim)
    x2d = x.reshape(batch * seq, input_dim)

    # Faithful forward (zero-initialized linear_out, exactly as in the module).
    prepared = prepare_params(params)
    out2d = simple_mlp_forward(x2d, prepared)
    jax.block_until_ready(out2d)
    out = out2d.reshape(batch, seq, input_dim)
    ref = simple_mlp_ref(x2d, params).reshape(batch, seq, input_dim)
    np.testing.assert_allclose(np.asarray(out), np.asarray(ref), atol=1e-5, rtol=1e-5)

    # Datapath check with a non-zero linear_out (exercises every matmul and the
    # streamed w_out axis); tolerance loosened because matmuls run in bf16 (f32 acc)
    # and linear_in is folded into up in bf16.
    bound = 1.0 / np.sqrt(input_dim)
    params_nz = dict(params)
    params_nz["w_out"] = jax.random.uniform(
        kw, (input_dim, input_dim), jnp.float32, -bound, bound)
    out_nz = simple_mlp_forward(x2d, prepare_params(params_nz))
    jax.block_until_ready(out_nz)
    ref_nz = simple_mlp_ref(x2d, params_nz)
    np.testing.assert_allclose(np.asarray(out_nz), np.asarray(ref_nz),
                               atol=5e-2, rtol=5e-2)

    print("KERNEL_OK")
</pallas_src>

<mosaic_0001>
module attributes {stable_mosaic.version = 11 : i64} {
  func.func @simple_mlp_kernel(%arg0: i32, %arg1: i32, %arg2: memref<8x128xf32, #tpu.memory_space<vmem>>, %arg3: memref<128x8xbf16, #tpu.memory_space<vmem>>, %arg4: memref<8x128xbf16, #tpu.memory_space<vmem>>, %arg5: memref<128x128xbf16, #tpu.memory_space<vmem>>, %arg6: memref<8x8xf32, #tpu.memory_space<vmem>>, %arg7: memref<8x128xf32, #tpu.memory_space<vmem>>, %arg8: memref<1x128xf32, #tpu.memory_space<vmem>>, %arg9: memref<8x128xf32, #tpu.memory_space<vmem>>, %arg10: memref<8x128xbf16, #tpu.memory_space<vmem>>) attributes {dimension_semantics = [#tpu.dimension_semantics<parallel>, #tpu.dimension_semantics<arbitrary>], iteration_bounds = array<i64: 2, 1>, scalar_prefetch = 0 : i64, scratch_operands = 1 : i64, tpu.core_type = #tpu.core_type<tc>, window_params = [{transform_indices = @transform_0, window_bounds = array<i64: 8, 128>}, {pipeline_mode = #tpu.pipeline_mode<synchronous>, transform_indices = @transform_1, window_bounds = array<i64: 128, 8>}, {pipeline_mode = #tpu.pipeline_mode<synchronous>, transform_indices = @transform_2, window_bounds = array<i64: 8, 128>}, {transform_indices = @transform_3, window_bounds = array<i64: 128, 128>}, {pipeline_mode = #tpu.pipeline_mode<synchronous>, transform_indices = @transform_4, window_bounds = array<i64: 8, 8>}, {pipeline_mode = #tpu.pipeline_mode<synchronous>, transform_indices = @transform_5, window_bounds = array<i64: 8, 128>}, {transform_indices = @transform_6, window_bounds = array<i64: 1, 128>}, {transform_indices = @transform_7, window_bounds = array<i64: 8, 128>}]} {
    %c0_i32 = arith.constant 0 : i32
    %0 = arith.cmpi eq, %arg1, %c0_i32 : i32
    %1 = arith.extui %0 : i1 to i32
    %c0_i32_0 = arith.constant 0 : i32
    %2 = arith.cmpi ne, %1, %c0_i32_0 : i32
    scf.if %2 {
      %c0_8 = arith.constant 0 : index
      %c0_9 = arith.constant 0 : index
      %10 = vector.load %arg6[%c0_8, %c0_9] : memref<8x8xf32, #tpu.memory_space<vmem>>, vector<1x8xf32>
      %c1 = arith.constant 1 : index
      %c0_10 = arith.constant 0 : index
      %11 = vector.load %arg6[%c1, %c0_10] : memref<8x8xf32, #tpu.memory_space<vmem>>, vector<1x8xf32>
      %c2 = arith.constant 2 : index
      %c0_11 = arith.constant 0 : index
      %12 = vector.load %arg6[%c2, %c0_11] : memref<8x8xf32, #tpu.memory_space<vmem>>, vector<1x8xf32>
      %c0_12 = arith.constant 0 : index
      %c0_13 = arith.constant 0 : index
      %13 = vector.load %arg7[%c0_12, %c0_13] : memref<8x128xf32, #tpu.memory_space<vmem>>, vector<1x128xf32>
      %c1_14 = arith.constant 1 : index
      %c0_15 = arith.constant 0 : index
      %14 = vector.load %arg7[%c1_14, %c0_15] : memref<8x128xf32, #tpu.memory_space<vmem>>, vector<1x128xf32>
      %c2_16 = arith.constant 2 : index
      %c0_17 = arith.constant 0 : index
      %15 = vector.load %arg7[%c2_16, %c0_17] : memref<8x128xf32, #tpu.memory_space<vmem>>, vector<1x128xf32>
      %c0_18 = arith.constant 0 : index
      %c0_19 = arith.constant 0 : index
      %16 = vector.load %arg2[%c0_18, %c0_19] : memref<8x128xf32, #tpu.memory_space<vmem>>, vector<8x128xf32>
      %17 = arith.truncf %16 : vector<8x128xf32> to vector<8x128xbf16>
      %c0_20 = arith.constant 0 : index
      %c0_21 = arith.constant 0 : index
      %18 = vector.load %arg3[%c0_20, %c0_21] : memref<128x8xbf16, #tpu.memory_space<vmem>>, vector<128x8xbf16>
      %cst_22 = arith.constant dense<0.000000e+00> : vector<8x8xf32>
      %19 = tpu.matmul %17, %18, %cst_22 {dimension_numbers = #tpu.dot_dimension_numbers<[1], [0], [0], [1], [0, 0, 1, 1], [], []>} : vector<8x128xbf16>, vector<128x8xbf16>, vector<8x8xf32> -> vector<8x8xf32>
      %20 = vector.broadcast %10 : vector<1x8xf32> to vector<8x8xf32>
      %21 = arith.addf %19, %20 : vector<8x8xf32>
      %cst_23 = arith.constant dense<0.000000e+00> : vector<8xf32>
      %22 = vector.multi_reduction <add>, %21, %cst_23 [1] : vector<8x8xf32> to vector<8xf32>
      %23 = vector.shape_cast %22 : vector<8xf32> to vector<8x1xf32>
      %cst_24 = arith.constant 8.000000e+00 : f32
      %24 = vector.broadcast %cst_24 : f32 to vector<8x1xf32>
      %25 = arith.divf %23, %24 : vector<8x1xf32>
      %26 = vector.broadcast %25 : vector<8x1xf32> to vector<8x8xf32>
      %27 = arith.subf %21, %26 : vector<8x8xf32>
      %28 = arith.mulf %27, %27 : vector<8x8xf32>
      %cst_25 = arith.constant dense<0.000000e+00> : vector<8xf32>
      %29 = vector.multi_reduction <add>, %28, %cst_25 [1] : vector<8x8xf32> to vector<8xf32>
      %30 = vector.shape_cast %29 : vector<8xf32> to vector<8x1xf32>
      %cst_26 = arith.constant 8.000000e+00 : f32
      %31 = vector.broadcast %cst_26 : f32 to vector<8x1xf32>
      %32 = arith.divf %30, %31 : vector<8x1xf32>
      %33 = vector.broadcast %25 : vector<8x1xf32> to vector<8x8xf32>
      %34 = arith.subf %21, %33 : vector<8x8xf32>
      %cst_27 = arith.constant 9.99999997E-7 : f32
      %35 = vector.broadcast %cst_27 : f32 to vector<8x1xf32>
      %36 = arith.addf %32, %35 : vector<8x1xf32>
      %37 = math.rsqrt %36 : vector<8x1xf32>
      %38 = vector.broadcast %37 : vector<8x1xf32> to vector<8x8xf32>
      %39 = arith.mulf %34, %38 : vector<8x8xf32>
      %40 = vector.broadcast %11 : vector<1x8xf32> to vector<8x8xf32>
      %41 = arith.mulf %39, %40 : vector<8x8xf32>
      %42 = vector.broadcast %12 : vector<1x8xf32> to vector<8x8xf32>
      %43 = arith.addf %41, %42 : vector<8x8xf32>
      %44 = arith.negf %43 : vector<8x8xf32>
      %45 = math.exp %44 : vector<8x8xf32>
      %cst_28 = arith.constant 1.000000e+00 : f32
      %46 = vector.broadcast %cst_28 : f32 to vector<8x8xf32>
      %47 = arith.addf %46, %45 : vector<8x8xf32>
      %48 = arith.divf %46, %47 : vector<8x8xf32>
      %49 = arith.mulf %43, %48 : vector<8x8xf32>
      %50 = arith.truncf %49 : vector<8x8xf32> to vector<8x8xbf16>
      %c0_29 = arith.constant 0 : index
      %c0_30 = arith.constant 0 : index
      %51 = vector.load %arg4[%c0_29, %c0_30] : memref<8x128xbf16, #tpu.memory_space<vmem>>, vector<8x128xbf16>
      %cst_31 = arith.constant dense<0.000000e+00> : vector<8x128xf32>
      %52 = tpu.matmul %50, %51, %cst_31 {dimension_numbers = #tpu.dot_dimension_numbers<[1], [0], [0], [1], [0, 0, 1, 1], [], []>} : vector<8x8xbf16>, vector<8x128xbf16>, vector<8x128xf32> -> vector<8x128xf32>
      %53 = vector.broadcast %13 : vector<1x128xf32> to vector<8x128xf32>
      %54 = arith.addf %52, %53 : vector<8x128xf32>
      %cst_32 = arith.constant dense<0.000000e+00> : vector<8xf32>
      %55 = vector.multi_reduction <add>, %54, %cst_32 [1] : vector<8x128xf32> to vector<8xf32>
      %56 = vector.shape_cast %55 : vector<8xf32> to vector<8x1xf32>
      %cst_33 = arith.constant 1.280000e+02 : f32
      %57 = vector.broadcast %cst_33 : f32 to vector<8x1xf32>
      %58 = arith.divf %56, %57 : vector<8x1xf32>
      %59 = vector.broadcast %58 : vector<8x1xf32> to vector<8x128xf32>
      %60 = arith.subf %54, %59 : vector<8x128xf32>
      %61 = arith.mulf %60, %60 : vector<8x128xf32>
      %cst_34 = arith.constant dense<0.000000e+00> : vector<8xf32>
      %62 = vector.multi_reduction <add>, %61, %cst_34 [1] : vector<8x128xf32> to vector<8xf32>
      %63 = vector.shape_cast %62 : vector<8xf32> to vector<8x1xf32>
      %cst_35 = arith.constant 1.280000e+02 : f32
      %64 = vector.broadcast %cst_35 : f32 to vector<8x1xf32>
      %65 = arith.divf %63, %64 : vector<8x1xf32>
      %66 = vector.broadcast %58 : vector<8x1xf32> to vector<8x128xf32>
      %67 = arith.subf %54, %66 : vector<8x128xf32>
      %cst_36 = arith.constant 9.99999997E-7 : f32
      %68 = vector.broadcast %cst_36 : f32 to vector<8x1xf32>
      %69 = arith.addf %65, %68 : vector<8x1xf32>
      %70 = math.rsqrt %69 : vector<8x1xf32>
      %71 = vector.broadcast %70 : vector<8x1xf32> to vector<8x128xf32>
      %72 = arith.mulf %67, %71 : vector<8x128xf32>
      %73 = vector.broadcast %14 : vector<1x128xf32> to vector<8x128xf32>
      %74 = arith.mulf %72, %73 : vector<8x128xf32>
      %75 = vector.broadcast %15 : vector<1x128xf32> to vector<8x128xf32>
      %76 = arith.addf %74, %75 : vector<8x128xf32>
      %77 = arith.negf %76 : vector<8x128xf32>
      %78 = math.exp %77 : vector<8x128xf32>
      %cst_37 = arith.constant 1.000000e+00 : f32
      %79 = vector.broadcast %cst_37 : f32 to vector<8x128xf32>
      %80 = arith.addf %79, %78 : vector<8x128xf32>
      %81 = arith.divf %79, %80 : vector<8x128xf32>
      %82 = arith.mulf %76, %81 : vector<8x128xf32>
      %83 = arith.truncf %82 : vector<8x128xf32> to vector<8x128xbf16>
      %c0_38 = arith.constant 0 : index
      %c0_39 = arith.constant 0 : index
      %84 = vector.load %arg10[%c0_38, %c0_39] : memref<8x128xbf16, #tpu.memory_space<vmem>>, vector<8x128xbf16>
      tpu.vector_store %arg10[%c0_38, %c0_39], %83 {strides = array<i32>} : memref<8x128xbf16, #tpu.memory_space<vmem>>, vector<8x128xbf16>,
    } else {
    }
    %c0 = arith.constant 0 : index
    %c0_1 = arith.constant 0 : index
    %3 = vector.load %arg10[%c0, %c0_1] : memref<8x128xbf16, #tpu.memory_space<vmem>>, vector<8x128xbf16>
    %c0_2 = arith.constant 0 : index
    %c0_3 = arith.constant 0 : index
    %4 = vector.load %arg5[%c0_2, %c0_3] : memref<128x128xbf16, #tpu.memory_space<vmem>>, vector<128x128xbf16>
    %cst = arith.constant dense<0.000000e+00> : vector<8x128xf32>
    %5 = tpu.matmul %3, %4, %cst {dimension_numbers = #tpu.dot_dimension_numbers<[1], [0], [0], [1], [0, 0, 1, 1], [], []>} : vector<8x128xbf16>, vector<128x128xbf16>, vector<8x128xf32> -> vector<8x128xf32>
    %c0_4 = arith.constant 0 : index
    %c0_5 = arith.constant 0 : index
    %6 = vector.load %arg8[%c0_4, %c0_5] : memref<1x128xf32, #tpu.memory_space<vmem>>, vector<1x128xf32>
    %7 = vector.broadcast %6 : vector<1x128xf32> to vector<8x128xf32>
    %8 = arith.addf %5, %7 : vector<8x128xf32>
    %c0_6 = arith.constant 0 : index
    %c0_7 = arith.constant 0 : index
    %9 = vector.load %arg9[%c0_6, %c0_7] : memref<8x128xf32, #tpu.memory_space<vmem>>, vector<8x128xf32>
    tpu.vector_store %arg9[%c0_6, %c0_7], %8 {strides = array<i32>} : memref<8x128xf32, #tpu.memory_space<vmem>>, vector<8x128xf32>,
    return
  }
  func.func @transform_0(%arg0: i32, %arg1: i32) -> (i32, i32) {
    %c0_i32 = arith.constant 0 : i32
    %c0_i32_0 = arith.constant 0 : i32
    return %arg0, %c0_i32 : i32, i32
  }
  func.func @transform_1(%arg0: i32, %arg1: i32) -> (i32, i32) {
    %c0_i32 = arith.constant 0 : i32
    %c0_i32_0 = arith.constant 0 : i32
    %c0_i32_1 = arith.constant 0 : i32
    return %c0_i32, %c0_i32_0 : i32, i32
  }
  func.func @transform_2(%arg0: i32, %arg1: i32) -> (i32, i32) {
    %c0_i32 = arith.constant 0 : i32
    %c0_i32_0 = arith.constant 0 : i32
    %c0_i32_1 = arith.constant 0 : i32
    return %c0_i32, %c0_i32_0 : i32, i32
  }
  func.func @transform_3(%arg0: i32, %arg1: i32) -> (i32, i32) {
    %c0_i32 = arith.constant 0 : i32
    %c0_i32_0 = arith.constant 0 : i32
    return %c0_i32, %arg1 : i32, i32
  }
  func.func @transform_4(%arg0: i32, %arg1: i32) -> (i32, i32) {
    %c0_i32 = arith.constant 0 : i32
    %c0_i32_0 = arith.constant 0 : i32
    %c0_i32_1 = arith.constant 0 : i32
    return %c0_i32, %c0_i32_0 : i32, i32
  }
  func.func @transform_5(%arg0: i32, %arg1: i32) -> (i32, i32) {
    %c0_i32 = arith.constant 0 : i32
    %c0_i32_0 = arith.constant 0 : i32
    %c0_i32_1 = arith.constant 0 : i32
    return %c0_i32, %c0_i32_0 : i32, i32
  }
  func.func @transform_6(%arg0: i32, %arg1: i32) -> (i32, i32) {
    %c0_i32 = arith.constant 0 : i32
    %c0_i32_0 = arith.constant 0 : i32
    return %c0_i32, %arg1 : i32, i32
  }
  func.func @transform_7(%arg0: i32, %arg1: i32) -> (i32, i32) {
    %c0_i32 = arith.constant 0 : i32
    return %arg0, %arg1 : i32, i32
  }
}

</mosaic_0001>

<llo_original>
// kernel: tpu_custom_call.1
$region0: #{tpu_custom_call.1}
  #allocation0 [shape = 'u32[]', space=smem, size = 0x4, offset = 0x4, fixed_abs, tag = 'smem constant byte address 0x4 - core index']
  #allocation1 [shape = 'u32[72,128]{1,0:T(1,128)}', space=vmem, size = 0x9000, scoped, tag = 'internal scratch']
  #allocation2 [shape = 'bf16[8,128]{1,0:T(8,128)(2,1)}', space=vmem, size = 0x800, scoped, tag = 'scratch operand']
  %s0 = inlined_call_operand.hbm [shape: f32[16,128], index: 0, kind: input, shape index: {}]
  %s1 = inlined_call_operand.vmem [shape: bf16[128,8], index: 1, kind: input, shape index: {}]
  %s2 = inlined_call_operand.hbm [shape: bf16[8,128], index: 2, kind: input, shape index: {}]
  %s3 = inlined_call_operand.vmem [shape: bf16[128,128], index: 3, kind: input, shape index: {}]
  %s4 = inlined_call_operand.hbm [shape: f32[8,8], index: 4, kind: input, shape index: {}]
  %s5 = inlined_call_operand.vmem [shape: f32[8,128], index: 5, kind: input, shape index: {}]
  %s6 = inlined_call_operand.vmem [shape: f32[1,128], index: 6, kind: input, shape index: {}]
  %s7 = inlined_call_operand.hbm [shape: f32[16,128], index: 7, kind: output, shape index: {}]
  %s8 = sld [smem:[#allocation0]]
  $region77: #{tpu_custom_call.1} parent=0
    _
  %s10 = ssub.s32 1, %s8
  %s11 = scalar_select 0, %s10, %s8
  $region1: #{tpu_custom_call.1} parent=0
    #allocation3 [shape = 'u8[8192]{0}', space=vmem, size = 0x2000, scoped, tag = 'input window, operand 0']
    #allocation4 [shape = 's32[2]{0}', space=sflag, size = 0x8, scoped, tag = 'scoped memory for tpu_custom_call.1']
    #allocation5 [shape = 's32[2]{0}', space=sflag, size = 0x8, scoped, tag = 'scoped memory for tpu_custom_call.1']
    #allocation6 [shape = 'u8[2048]{0}', space=vmem, size = 0x800, scoped, tag = 'input window, operand 2, single buffered']
    #allocation7 [shape = 's32[1]{0}', space=sflag, size = 0x4, scoped, tag = 'scoped memory for tpu_custom_call.1']
    #allocation8 [shape = 'u8[4096]{0}', space=vmem, size = 0x1000, scoped, tag = 'input window, operand 4, single buffered']
    #allocation9 [shape = 'u8[8192]{0}', space=vmem, size = 0x2000, scoped, tag = 'output window, operand 0']
    %12 = vsyncpa [#allocation4], 0
    %s13 = scalar_lea.sflag [#allocation4], 1
    %14 = vsyncpa %s13, 0
    %15 = vsyncpa [#allocation7], 0
    %16 = vsyncpa [#allocation5], 0
    %s17 = scalar_lea.sflag [#allocation5], 1
    %18 = vsyncpa %s17, 0
    loop: start=0, step=1, limit=4
    $region2: #{tpu_custom_call.1} parent=1 // loop_pre_header
      _
    $region3: #{tpu_custom_call.1} parent=1 // loop_header
      %s20 = sphi 0, %s24
      %p21 = scmp.ge.s32.totalorder %s20, 4
      %s27 = sphi 0, %s39
      %s28 = sphi 0, %s35
      %s29 = sphi 0, %s27
      %s30 = sphi 0, %s28
      %s31 = sphi 0, %s29
      %s32 = sphi 0, %s30
      %s42 = sphi 0, %s44
      %s45 = sphi 0, %s42
      %s46 = sphi 0, %s45
      %s62 = sphi 0, %s46
      %s66 = sphi 0, %s66
      %s68 = sphi 0, %s66
      %s69 = sphi 0, %s68
      %s83 = sphi 0, %s69
      %s87 = sphi 0, %s87
      %s89 = sphi 0, %s87
      %s90 = sphi 0, %s89
      %s104 = sphi 0, %s90
      %s110 = sphi 0, %s112
      %s113 = sphi 0, %s110
      %s114 = sphi 0, %s113
      %s130 = sphi 0, %s114
      %s134 = sphi 0, %s134
      %s136 = sphi 0, %s134
      %s137 = sphi 0, %s136
      %s151 = sphi 0, %s137
      %s155 = sphi 0, %s155
      %s157 = sphi 0, %s155
      %s158 = sphi 0, %s157
      %s172 = sphi 0, %s158
      %s178 = sphi 0, %s180
      %s181 = sphi 0, %s178
      %s182 = sphi 0, %s181
      %s198 = sphi 0, %s182
      %s206 = sphi 0, %s208
      %s209 = sphi 0, %s206
      %s210 = sphi 0, %s209
      %s226 = sphi 0, %s210
    $region4: #{tpu_custom_call.1} parent=1 // loop_header_branch
      %23 = sbr.rel (%p21) target = $region8
    $region5: #{tpu_custom_call.1} parent=1 // loop_body
      %s25 = ssub.s32 %s20, 1
      %s26 = ssub.s32 %s20, 2
      %s33 = sadd.s32 1, %s28
      %p34 = scmp.ge.s32.totalorder %s33, 1
      %s35 = scalar_select %p34, 0, %s33
      %s36 = sadd.s32 1, %s27
      %s37 = scalar_select %p34, %s36, %s27
      %p38 = scmp.ge.s32.totalorder %s37, 2
      %s39 = scalar_select %p38, 0, %s37
      %s40 = ssub.s32 %s27, %s39
      %p41 = scmp.eq.s32.totalorder %s40, 0
      %s43 = sadd.s32 %s42, 1
      %s44 = scalar_select %p41, %s42, %s43
      %p47 = pneg %p41
      %p48 = scmp.eq.s32.totalorder %s20, 1
      %p49 = por %p47, %p48
      %p50 = scmp.ne.s32.totalorder %s42, %s45
      %p51 = scmp.eq.s32.totalorder %s20, 0
      %p52 = por %p50, %p51
      %p53 = scmp.ne.s32.totalorder %s42, %s45
      %p54 = scmp.eq.s32.totalorder %s25, 1
      %p55 = por %p53, %p54
      %p56 = scmp.ne.s32.totalorder %s45, %s46
      %p57 = scmp.eq.s32.totalorder %s25, 0
      %p58 = por %p56, %p57
      %p59 = scmp.ne.s32.totalorder %s45, %s46
      %p60 = scmp.eq.s32.totalorder %s26, 1
      %p61 = por %p59, %p60
      %p63 = scmp.ne.s32.totalorder %s46, %s62
      %p64 = scmp.eq.s32.totalorder %s26, 0
      %p65 = por %p63, %p64
      %s67 = sadd.s32 %s66, 1
      %p70 = scmp.eq.s32.totalorder %s20, 1
      %p71 = scmp.ne.s32.totalorder %s66, %s68
      %p72 = scmp.eq.s32.totalorder %s20, 0
      %p73 = por %p71, %p72
      %p74 = scmp.ne.s32.totalorder %s66, %s68
      %p75 = scmp.eq.s32.totalorder %s25, 1
      %p76 = por %p74, %p75
      %p77 = scmp.ne.s32.totalorder %s68, %s69
      %p78 = scmp.eq.s32.totalorder %s25, 0
      %p79 = por %p77, %p78
      %p80 = scmp.ne.s32.totalorder %s68, %s69
      %p81 = scmp.eq.s32.totalorder %s26, 1
      %p82 = por %p80, %p81
      %p84 = scmp.ne.s32.totalorder %s69, %s83
      %p85 = scmp.eq.s32.totalorder %s26, 0
      %p86 = por %p84, %p85
      %s88 = sadd.s32 %s87, 1
      %p91 = scmp.eq.s32.totalorder %s20, 1
      %p92 = scmp.ne.s32.totalorder %s87, %s89
      %p93 = scmp.eq.s32.totalorder %s20, 0
      %p94 = por %p92, %p93
      %p95 = scmp.ne.s32.totalorder %s87, %s89
      %p96 = scmp.eq.s32.totalorder %s25, 1
      %p97 = por %p95, %p96
      %p98 = scmp.ne.s32.totalorder %s89, %s90
      %p99 = scmp.eq.s32.totalorder %s25, 0
      %p100 = por %p98, %p99
      %p101 = scmp.ne.s32.totalorder %s89, %s90
      %p102 = scmp.eq.s32.totalorder %s26, 1
      %p103 = por %p101, %p102
      %p105 = scmp.ne.s32.totalorder %s90, %s104
      %p106 = scmp.eq.s32.totalorder %s26, 0
      %p107 = por %p105, %p106
      %s108 = ssub.s32 %s28, %s35
      %p109 = scmp.eq.s32.totalorder %s108, 0
      %s111 = sadd.s32 %s110, 1
      %s112 = scalar_select %p109, %s110, %s111
      %p115 = pneg %p109
      %p116 = scmp.eq.s32.totalorder %s20, 1
      %p117 = por %p115, %p116
      %p118 = scmp.ne.s32.totalorder %s110, %s113
      %p119 = scmp.eq.s32.totalorder %s20, 0
      %p120 = por %p118, %p119
      %p121 = scmp.ne.s32.totalorder %s110, %s113
      %p122 = scmp.eq.s32.totalorder %s25, 1
      %p123 = por %p121, %p122
      %p124 = scmp.ne.s32.totalorder %s113, %s114
      %p125 = scmp.eq.s32.totalorder %s25, 0
      %p126 = por %p124, %p125
      %p127 = scmp.ne.s32.totalorder %s113, %s114
      %p128 = scmp.eq.s32.totalorder %s26, 1
      %p129 = por %p127, %p128
      %p131 = scmp.ne.s32.totalorder %s114, %s130
      %p132 = scmp.eq.s32.totalorder %s26, 0
      %p133 = por %p131, %p132
      %s135 = sadd.s32 %s134, 1
      %p138 = scmp.eq.s32.totalorder %s20, 1
      %p139 = scmp.ne.s32.totalorder %s134, %s136
      %p140 = scmp.eq.s32.totalorder %s20, 0
      %p141 = por %p139, %p140
      %p142 = scmp.ne.s32.totalorder %s134, %s136
      %p143 = scmp.eq.s32.totalorder %s25, 1
      %p144 = por %p142, %p143
      %p145 = scmp.ne.s32.totalorder %s136, %s137
      %p146 = scmp.eq.s32.totalorder %s25, 0
      %p147 = por %p145, %p146
      %p148 = scmp.ne.s32.totalorder %s136, %s137
      %p149 = scmp.eq.s32.totalorder %s26, 1
      %p150 = por %p148, %p149
      %p152 = scmp.ne.s32.totalorder %s137, %s151
      %p153 = scmp.eq.s32.totalorder %s26, 0
      %p154 = por %p152, %p153
      %s156 = sadd.s32 %s155, 1
      %p159 = scmp.eq.s32.totalorder %s20, 1
      %p160 = scmp.ne.s32.totalorder %s155, %s157
      %p161 = scmp.eq.s32.totalorder %s20, 0
      %p162 = por %p160, %p161
      %p163 = scmp.ne.s32.totalorder %s155, %s157
      %p164 = scmp.eq.s32.totalorder %s25, 1
      %p165 = por %p163, %p164
      %p166 = scmp.ne.s32.totalorder %s157, %s158
      %p167 = scmp.eq.s32.totalorder %s25, 0
      %p168 = por %p166, %p167
      %p169 = scmp.ne.s32.totalorder %s157, %s158
      %p170 = scmp.eq.s32.totalorder %s26, 1
      %p171 = por %p169, %p170
      %p173 = scmp.ne.s32.totalorder %s158, %s172
      %p174 = scmp.eq.s32.totalorder %s26, 0
      %p175 = por %p173, %p174
      %s176 = ssub.s32 %s28, %s35
      %p177 = scmp.eq.s32.totalorder %s176, 0
      %s179 = sadd.s32 %s178, 1
      %s180 = scalar_select %p177, %s178, %s179
      %p183 = pneg %p177
      %p184 = scmp.eq.s32.totalorder %s20, 1
      %p185 = por %p183, %p184
      %p186 = scmp.ne.s32.totalorder %s178, %s181
      %p187 = scmp.eq.s32.totalorder %s20, 0
      %p188 = por %p186, %p187
      %p189 = scmp.ne.s32.totalorder %s178, %s181
      %p190 = scmp.eq.s32.totalorder %s25, 1
      %p191 = por %p189, %p190
      %p192 = scmp.ne.s32.totalorder %s181, %s182
      %p193 = scmp.eq.s32.totalorder %s25, 0
      %p194 = por %p192, %p193
      %p195 = scmp.ne.s32.totalorder %s181, %s182
      %p196 = scmp.eq.s32.totalorder %s26, 1
      %p197 = por %p195, %p196
      %p199 = scmp.ne.s32.totalorder %s182, %s198
      %p200 = scmp.eq.s32.totalorder %s26, 0
      %p201 = por %p199, %p200
      %s202 = ssub.s32 %s27, %s39
      %s203 = ssub.s32 %s28, %s35
      %s204 = sor.u32 %s202, %s203
      %p205 = scmp.eq.s32.totalorder %s204, 0
      %s207 = sadd.s32 %s206, 1
      %s208 = scalar_select %p205, %s206, %s207
      %p211 = pneg %p205
      %p212 = scmp.eq.s32.totalorder %s20, 1
      %p213 = por %p211, %p212
      %p214 = scmp.ne.s32.totalorder %s206, %s209
      %p215 = scmp.eq.s32.totalorder %s20, 0
      %p216 = por %p214, %p215
      %p217 = scmp.ne.s32.totalorder %s206, %s209
      %p218 = scmp.eq.s32.totalorder %s25, 1
      %p219 = por %p217, %p218
      %p220 = scmp.ne.s32.totalorder %s209, %s210
      %p221 = scmp.eq.s32.totalorder %s25, 0
      %p222 = por %p220, %p221
      %p223 = scmp.ne.s32.totalorder %s209, %s210
      %p224 = scmp.eq.s32.totalorder %s26, 1
      %p225 = por %p223, %p224
      %p227 = scmp.ne.s32.totalorder %s210, %s226
      %p228 = scmp.eq.s32.totalorder %s26, 0
      %p229 = por %p227, %p228
      %p230 = scmp.le.s32.totalorder 1, %s20
      %p231 = scmp.lt.s32.totalorder %s20, 3
      %p232 = pnand %p230, %p231
      %p233 = pneg %p232
      // Predicated region
      $region9: #{tpu_custom_call.1} parent=5 // pred_check
        _
      $region10: #{tpu_custom_call.1} parent=5 // pred_check_branch
        %235 = sbr.rel (%p232) target = $region12
      $region11: #{tpu_custom_call.1} parent=5 // pred_region
        %s236 = ssub.s32 %s20, 1
        // Predicated region
        $region13: #{tpu_custom_call.1} parent=11 // pred_check
          %p237 = pneg %p79
        $region14: #{tpu_custom_call.1} parent=11 // pred_check_branch
          %239 = sbr.rel (%p237) target = $region16
        $region15: #{tpu_custom_call.1} parent=11 // pred_region
          _
        $region16: #{tpu_custom_call.1} parent=11 // pred_fallthru
          _
        // Predicated region
        $region17: #{tpu_custom_call.1} parent=11 // pred_check
          %p240 = pneg %p100
        $region18: #{tpu_custom_call.1} parent=11 // pred_check_branch
          %242 = sbr.rel (%p240) target = $region20
        $region19: #{tpu_custom_call.1} parent=11 // pred_region
          %244 = vsyncadd [#allocation7], 0
          %s246 = sshll.u32 %s2, 4
          %s247 = int_to_ptr.hbm [resolvable:$true] %s246
          %s248 = sshll.u32 [#allocation6], 4
          %s249 = int_to_ptr.vmem [resolvable:$true] %s248
          %251 = dma.hbm_to_vmem [thread:$0]  %s247, 64, %s249, [#allocation7]
        $region20: #{tpu_custom_call.1} parent=11 // pred_fallthru
          _
        // Predicated region
        $region21: #{tpu_custom_call.1} parent=11 // pred_check
          %p252 = pneg %p126
        $region22: #{tpu_custom_call.1} parent=11 // pred_check_branch
          %254 = sbr.rel (%p252) target = $region24
        $region23: #{tpu_custom_call.1} parent=11 // pred_region
          %p255 = scmp.lt.s32.totalorder %s30, 0
          %s256 = scalar_select %p255, %s30, 0
          %s257 = smul.addr %s256, 4
          %s258 = scalar_lea.vmem %s3, %s257
        $region24: #{tpu_custom_call.1} parent=11 // pred_fallthru
          _
        // Predicated region
        $region25: #{tpu_custom_call.1} parent=11 // pred_check
          %p259 = pneg %p147
        $region26: #{tpu_custom_call.1} parent=11 // pred_check_branch
          %261 = sbr.rel (%p259) target = $region28
        $region27: #{tpu_custom_call.1} parent=11 // pred_region
          %263 = vsyncadd [#allocation7], 0
          %s265 = sshll.u32 %s4, 4
          %s266 = int_to_ptr.hbm [resolvable:$true] %s265
          %s267 = sshll.u32 [#allocation8], 4
          %s268 = int_to_ptr.vmem [resolvable:$true] %s267
          %270 = dma.hbm_to_vmem [thread:$0]  %s266, 128, %s268, [#allocation7]
        $region28: #{tpu_custom_call.1} parent=11 // pred_fallthru
          _
        // Predicated region
        $region29: #{tpu_custom_call.1} parent=11 // pred_check
          %p271 = pneg %p168
        $region30: #{tpu_custom_call.1} parent=11 // pred_check_branch
          %273 = sbr.rel (%p271) target = $region32
        $region31: #{tpu_custom_call.1} parent=11 // pred_region
          _
        $region32: #{tpu_custom_call.1} parent=11 // pred_fallthru
          _
        // Predicated region
        $region33: #{tpu_custom_call.1} parent=11 // pred_check
          %p274 = pneg %p194
        $region34: #{tpu_custom_call.1} parent=11 // pred_check_branch
          %276 = sbr.rel (%p274) target = $region36
        $region35: #{tpu_custom_call.1} parent=11 // pred_region
          %p277 = scmp.lt.s32.totalorder %s30, 0
          %s278 = scalar_select %p277, %s30, 0
          %s279 = scalar_lea.vmem %s6, %s278
        $region36: #{tpu_custom_call.1} parent=11 // pred_fallthru
          _
      $region12: #{tpu_custom_call.1} parent=5 // pred_fallthru
        _
      %p280 = scmp.lt.s32.totalorder %s20, 2
      // Predicated region
      $region37: #{tpu_custom_call.1} parent=5 // pred_check
        %p281 = pneg %p280
      $region38: #{tpu_custom_call.1} parent=5 // pred_check_branch
        %283 = sbr.rel (%p281) target = $region40
      $region39: #{tpu_custom_call.1} parent=5 // pred_region
        // Predicated region
        $region41: #{tpu_custom_call.1} parent=39 // pred_check
          %p284 = pneg %p52
        $region42: #{tpu_custom_call.1} parent=39 // pred_check_branch
          %286 = sbr.rel (%p284) target = $region44
        $region43: #{tpu_custom_call.1} parent=39 // pred_region
          %s287 = sand.u32 %s42, 1
          %s288 = scalar_lea.sflag [#allocation4], %s287
          %s289 = sand.u32 %s42, 1
          %s290 = smul.addr %s289, 8
          %s291 = scalar_lea.vmem [#allocation3], %s290
          %293 = vsyncadd %s288, 0
          %s294 = smul.addr %s27, 8
          %s295 = scalar_lea.hbm %s0, %s294
          %s297 = sshll.u32 %s295, 4
          %s298 = int_to_ptr.hbm [resolvable:$true] %s297
          %s299 = sshll.u32 %s291, 4
          %s300 = int_to_ptr.vmem [resolvable:$true] %s299
          %302 = dma.hbm_to_vmem [thread:$0]  %s298, 128, %s300, %s288
        $region44: #{tpu_custom_call.1} parent=39 // pred_fallthru
          _
      $region40: #{tpu_custom_call.1} parent=5 // pred_fallthru
        _
      %p303 = scmp.le.s32.totalorder 1, %s20
      %p304 = scmp.lt.s32.totalorder %s20, 3
      %p305 = pnand %p303, %p304
      %p306 = pneg %p305
      // Predicated region
      $region45: #{tpu_custom_call.1} parent=5 // pred_check
        _
      $region46: #{tpu_custom_call.1} parent=5 // pred_check_branch
        %308 = sbr.rel (%p305) target = $region48
      $region47: #{tpu_custom_call.1} parent=5 // pred_region
        %s309 = ssub.s32 %s20, 1
        %s310 = sand.u32 %s45, 1
        %s311 = scalar_lea.sflag [#allocation4], %s310
        %s312 = sand.u32 %s45, 1
        %s313 = smul.addr %s312, 8
        %s314 = scalar_lea.vmem [#allocation3], %s313
        // Predicated region
        $region49: #{tpu_custom_call.1} parent=47 // pred_check
          %p315 = pneg %p58
        $region50: #{tpu_custom_call.1} parent=47 // pred_check_branch
          %317 = sbr.rel (%p315) target = $region52
        $region51: #{tpu_custom_call.1} parent=47 // pred_region
          %319 = dma.done %s311, 128
        $region52: #{tpu_custom_call.1} parent=47 // pred_fallthru
          _
        // Predicated region
        $region53: #{tpu_custom_call.1} parent=47 // pred_check
          %p320 = pneg %p100
        $region54: #{tpu_custom_call.1} parent=47 // pred_check_branch
          %322 = sbr.rel (%p320) target = $region56
        $region55: #{tpu_custom_call.1} parent=47 // pred_region
          %324 = dma.done [#allocation7], 64
        $region56: #{tpu_custom_call.1} parent=47 // pred_fallthru
          _
        // Predicated region
        $region57: #{tpu_custom_call.1} parent=47 // pred_check
          %p325 = pneg %p147
        $region58: #{tpu_custom_call.1} parent=47 // pred_check_branch
          %327 = sbr.rel (%p325) target = $region60
        $region59: #{tpu_custom_call.1} parent=47 // pred_region
          %329 = dma.done [#allocation7], 128
        $region60: #{tpu_custom_call.1} parent=47 // pred_fallthru
          _
        %s330 = sand.u32 %s45, 1
        %s331 = scalar_lea.sflag [#allocation4], %s330
        %s332 = sand.u32 %s45, 1
        %s333 = smul.addr %s332, 8
        %s334 = scalar_lea.vmem [#allocation3], %s333
        %p335 = pneg %p58
        %p336 = pneg %p55
        %p337 = pneg %p79
        %p338 = pneg %p76
        %p339 = pneg %p100
        %p340 = pneg %p97
        %p341 = scmp.lt.s32.totalorder %s30, 0
        %s342 = scalar_select %p341, %s30, 0
        %s343 = smul.addr %s342, 4
        %s344 = scalar_lea.vmem %s3, %s343
        %p345 = pneg %p126
        %p346 = pneg %p123
        %p347 = pneg %p147
        %p348 = pneg %p144
        %p349 = pneg %p168
        %p350 = pneg %p165
        %p351 = scmp.lt.s32.totalorder %s30, 0
        %s352 = scalar_select %p351, %s30, 0
        %s353 = scalar_lea.vmem %s6, %s352
        %p354 = pneg %p194
        %p355 = pneg %p191
        %p356 = pneg %p222
        %p357 = pneg %p219
        %s358 = sand.u32 %s209, 1
        %s359 = scalar_lea.sflag [#allocation5], %s358
        %s360 = sand.u32 %s209, 1
        %s361 = smul.addr %s360, 8
        %s362 = scalar_lea.vmem [#allocation9], %s361
        %p363 = scmp.lt.s32.totalorder %s30, 0
        %s364 = scalar_select %p363, %s30, 0
        %s365 = smul.addr %s364, 4
        %s366 = scalar_lea.vmem %s3, %s365
        %p367 = scmp.lt.s32.totalorder %s30, 0
        %s368 = scalar_select %p367, %s30, 0
        %s369 = scalar_lea.vmem %s6, %s368
        %p371 = scmp.eq.s32.totalorder %s30, 0
        // Predicated region
        $region61: #{tpu_custom_call.1} parent=47 // pred_check
          %p372 = pneg %p371
        $region62: #{tpu_custom_call.1} parent=47 // pred_check_branch
          %374 = sbr.rel (%p372) target = $region64
        $region63: #{tpu_custom_call.1} parent=47 // pred_region
          %v375 = vld [vmem:[#allocation8] sm:$0x1]
          %v376 = vld [vmem:[#allocation8 + $0x1] sm:$0x1]
          %v377 = vld [vmem:[#allocation8 + $0x2] sm:$0x1]
          %v378 = vld [vmem:[%s5] sm:$0x1]
          %v379 = vld [vmem:[%s5 + $0x1] sm:$0x1]
          %v380 = vld [vmem:[%s5 + $0x2] sm:$0x1]
          %v381 = vld [vmem:[%s314] sm:$0xff]
          %v382 = vpack.c.bf16 %v381, %v381
          %v383 = vld [vmem:[%s1] sm:$0xf]
          %v384 = vld [vmem:[%s1 + $0x4] sm:$0xf]
          %v385 = vld [vmem:[%s1 + $0x8] sm:$0xf]
          %v386 = vld [vmem:[%s1 + $0xc] sm:$0xf]
          %v387 = vld [vmem:[%s1 + $0x10] sm:$0xf]
          %v388 = vld [vmem:[%s1 + $0x14] sm:$0xf]
          %v389 = vld [vmem:[%s1 + $0x18] sm:$0xf]
          %v390 = vld [vmem:[%s1 + $0x1c] sm:$0xf]
          %v391 = vld [vmem:[%s1 + $0x20] sm:$0xf]
          %v392 = vld [vmem:[%s1 + $0x24] sm:$0xf]
          %v393 = vld [vmem:[%s1 + $0x28] sm:$0xf]
          %v394 = vld [vmem:[%s1 + $0x2c] sm:$0xf]
          %v395 = vld [vmem:[%s1 + $0x30] sm:$0xf]
          %v396 = vld [vmem:[%s1 + $0x34] sm:$0xf]
          %v397 = vld [vmem:[%s1 + $0x38] sm:$0xf]
          %v398 = vld [vmem:[%s1 + $0x3c] sm:$0xf]
          %v399 = vperm.slane %v375, 0
          %v416 = vunpack.c.l.b16 %v383
          %v417 = vunpack.c.l.b16 %v384
          %v418 = vunpack.c.l.b16 %v385
          %v419 = vunpack.c.l.b16 %v386
          %v420 = vunpack.c.l.b16 %v387
          %v421 = vunpack.c.l.b16 %v388
          %v422 = vunpack.c.l.b16 %v389
          %v423 = vunpack.c.l.b16 %v390
          %v424 = vunpack.c.l.b16 %v391
          %v425 = vunpack.c.l.b16 %v392
          %v426 = vunpack.c.l.b16 %v393
          %v427 = vunpack.c.l.b16 %v394
          %v428 = vunpack.c.l.b16 %v395
          %v429 = vunpack.c.l.b16 %v396
          %v430 = vunpack.c.l.b16 %v397
          %v431 = vunpack.c.l.b16 %v398
          %v432 = vpack.c.b16 %v417, %v416
          %v433 = vpack.c.b16 %v419, %v418
          %v434 = vpack.c.b16 %v421, %v420
          %v435 = vpack.c.b16 %v423, %v422
          %v436 = vpack.c.b16 %v425, %v424
          %v437 = vpack.c.b16 %v427, %v426
          %v438 = vpack.c.b16 %v429, %v428
          %v439 = vpack.c.b16 %v431, %v430
          %448 = vmatpush.bf16.msra.mxu0 %v439
          %449 = vmatpush.bf16.msra.mxu0 %v438
          %450 = vmatpush.bf16.msra.mxu0 %v437
          %451 = vmatpush.bf16.msra.mxu0 %v436
          %452 = vmatpush.bf16.msra.mxu0 %v435
          %453 = vmatpush.bf16.msra.mxu0 %v434
          %454 = vmatpush.bf16.msra.mxu0 %v433
          %455 = vmatpush.bf16.msra.mxu0 %v432
          %456 = vmatmul.bf16.gmra.mxu0 %v382
          %v457 = vpop.f32.mrf.mxu0
          %v458 = vadd.f32 %v399, %v457
          %v459 = vpop.f32.mrf.mxu0
          %460 = vdwg.mxu0
          %vm461 = vcmask 64512
          %v462 = vsel %vm461, %v458, 0.0
          %463 = vadd.xlane.f32.xlu0 %v462
          %v464 = vpop.xlane.xlu0 %463
          %v465 = vrcp.pop 8.0
          %v466 = vmul.f32 8.0, %v465
          %v467 = vsub.f32 1.0, %v466
          %v468 = vmul.f32 %v465, %v467
          %v469 = vadd.f32 %v465, %v468
          %vm470 = vweird.f32 %v465
          %v471 = vsel %vm470, %v465, %v469
          %v472 = vmul.f32 %v464, %v471
          %v473 = vsub.f32 %v458, %v472
          %v474 = vmul.f32 %v473, %v473
          %v475 = vsel %vm461, %v474, 0.0
          %476 = vadd.xlane.f32.xlu0 %v475
          %v477 = vpop.xlane.xlu0 %476
          %v478 = vmul.f32 %v477, %v471
          %v479 = vadd.f32 %v478, 1e-06
          %v480 = vrsqrt.pop %v479
          %v481 = vmul.f32 %v480, %v479
          %v482 = vmul.f32 %v481, %v480
          %v483 = vmul.f32 0.5, %v482
          %v484 = vsub.f32 1.5, %v483
          %v485 = vmul.f32 %v480, %v484
          %vm486 = vweird.f32 %v479
          %vm487 = vweird.f32 %v480
          %vm488 = vmor %vm486, %vm487
          %v489 = vsel %vm488, %v480, %v485
          %v490 = vmul.f32 %v473, %v489
          %v491 = vperm.slane %v376, 0
          %v492 = vmul.f32 %v490, %v491
          %v493 = vperm.slane %v377, 0
          %v494 = vadd.f32 %v492, %v493
          %v495 = vxor.u32 %v494, 2147483648
          %v496 = vmul.f32 %v495, 1.442695
          %v497 = vpow.pop %v496
          %v498 = vadd.f32 %v497, 1.0
          %v499 = vrcp.pop %v498
          %v500 = vmul.f32 %v498, %v499
          %v501 = vsub.f32 1.0, %v500
          %v502 = vmul.f32 %v499, %v501
          %v503 = vadd.f32 %v499, %v502
          %vm504 = vweird.f32 %v498
          %vm505 = vweird.f32 %v499
          %vm506 = vmor %vm504, %vm505
          %v507 = vsel %vm506, %v499, %v503
          %v508 = vand.u32 2147483647, %v498
          %vm509 = vcmp.eq.f32.partialorder %v508, 8.507059e+37
          %v510 = vand.u32 %v498, 2147483648
          %v511 = vor.u32 1.1754944e-38, %v510
          %v512 = vsel %vm509, %v511, %v507
          %v513 = vmul.f32 1.0, %v512
          %v514 = vmul.f32 %v494, %v513
          %v515 = vpack.c.bf16 %v514, %v514
          %v516 = vld [vmem:[#allocation6] sm:$0xf]
          %v517 = vperm.slane %v378, 0
          %v519 = vsel %vm461, %v515, 0
          %vm521 = vcmask 1043456
          %v523 = vsel %vm521, %v516, 0
          %525 = vmatpush.bf16.msra.mxu0 0
          %526 = vmatpush.bf16.msra.mxu0 0
          %527 = vmatpush.bf16.msra.mxu0 0
          %528 = vmatpush.bf16.msra.mxu0 0
          %529 = vmatpush.bf16.msra.mxu0 0
          %530 = vmatpush.bf16.msra.mxu0 0
          %531 = vmatpush.bf16.msra.mxu0 0
          %532 = vmatpush.bf16.msra.mxu0 %v523
          %533 = vmatmul.bf16.gmra.mxu0 %v519
          %v534 = vpop.f32.mrf.mxu0
          %v535 = vadd.f32 %v517, %v534
          %v536 = vpop.f32.mrf.mxu0
          %537 = vdwg.mxu0
          %538 = vadd.xlane.f32.xlu0 %v535
          %v539 = vpop.xlane.xlu0 %538
          %v540 = vrcp.pop 128.0
          %v541 = vmul.f32 128.0, %v540
          %v542 = vsub.f32 1.0, %v541
          %v543 = vmul.f32 %v540, %v542
          %v544 = vadd.f32 %v540, %v543
          %vm545 = vweird.f32 %v540
          %v546 = vsel %vm545, %v540, %v544
          %v547 = vmul.f32 %v539, %v546
          %v548 = vsub.f32 %v535, %v547
          %v549 = vmul.f32 %v548, %v548
          %550 = vadd.xlane.f32.xlu0 %v549
          %v551 = vpop.xlane.xlu0 %550
          %v552 = vmul.f32 %v551, %v546
          %v553 = vadd.f32 %v552, 1e-06
          %v554 = vrsqrt.pop %v553
          %v555 = vmul.f32 %v554, %v553
          %v556 = vmul.f32 %v555, %v554
          %v557 = vmul.f32 0.5, %v556
          %v558 = vsub.f32 1.5, %v557
          %v559 = vmul.f32 %v554, %v558
          %vm560 = vweird.f32 %v553
          %vm561 = vweird.f32 %v554
          %vm562 = vmor %vm560, %vm561
          %v563 = vsel %vm562, %v554, %v559
          %v564 = vmul.f32 %v548, %v563
          %v565 = vperm.slane %v379, 0
          %v566 = vmul.f32 %v564, %v565
          %v567 = vperm.slane %v380, 0
          %v568 = vadd.f32 %v566, %v567
          %v569 = vxor.u32 %v568, 2147483648
          %v570 = vmul.f32 %v569, 1.442695
          %v571 = vpow.pop %v570
          %v572 = vadd.f32 %v571, 1.0
          %v573 = vrcp.pop %v572
          %v574 = vmul.f32 %v572, %v573
          %v575 = vsub.f32 1.0, %v574
          %v576 = vmul.f32 %v573, %v575
          %v577 = vadd.f32 %v573, %v576
          %vm578 = vweird.f32 %v572
          %vm579 = vweird.f32 %v573
          %vm580 = vmor %vm578, %vm579
          %v581 = vsel %vm580, %v573, %v577
          %v582 = vand.u32 2147483647, %v572
          %vm583 = vcmp.eq.f32.partialorder %v582, 8.507059e+37
          %v584 = vand.u32 %v572, 2147483648
          %v585 = vor.u32 1.1754944e-38, %v584
          %v586 = vsel %vm583, %v585, %v581
          %v587 = vmul.f32 1.0, %v586
          %v588 = vmul.f32 %v568, %v587
          %v589 = vpack.c.bf16 %v588, %v588
          %590 = vst [vmem:[#allocation2] sm:$0xf] %v589
        $region64: #{tpu_custom_call.1} parent=47 // pred_fallthru
          _
        %v591 = vld [vmem:[#allocation2] sm:$0xf]
        %v592 = vld [vmem:[%s366] sm:$0xf]
        %v593 = vld [vmem:[%s366 + $0x4] sm:$0xf]
        %v594 = vld [vmem:[%s366 + $0x8] sm:$0xf]
        %v595 = vld [vmem:[%s366 + $0xc] sm:$0xf]
        %v596 = vld [vmem:[%s366 + $0x10] sm:$0xf]
        %v597 = vld [vmem:[%s366 + $0x14] sm:$0xf]
        %v598 = vld [vmem:[%s366 + $0x18] sm:$0xf]
        %v599 = vld [vmem:[%s366 + $0x1c] sm:$0xf]
        %v600 = vld [vmem:[%s366 + $0x20] sm:$0xf]
        %v601 = vld [vmem:[%s366 + $0x24] sm:$0xf]
        %v602 = vld [vmem:[%s366 + $0x28] sm:$0xf]
        %v603 = vld [vmem:[%s366 + $0x2c] sm:$0xf]
        %v604 = vld [vmem:[%s366 + $0x30] sm:$0xf]
        %v605 = vld [vmem:[%s366 + $0x34] sm:$0xf]
        %v606 = vld [vmem:[%s366 + $0x38] sm:$0xf]
        %v607 = vld [vmem:[%s366 + $0x3c] sm:$0xf]
        %v608 = vld [vmem:[%s369] sm:$0x1]
        %v610 = vperm.slane %v608, 0
        %v628 = vunpack.c.l.b16 %v592
        %v629 = vunpack.c.l.b16 %v593
        %v630 = vunpack.c.l.b16 %v594
        %v631 = vunpack.c.l.b16 %v595
        %v632 = vunpack.c.l.b16 %v596
        %v633 = vunpack.c.l.b16 %v597
        %v634 = vunpack.c.l.b16 %v598
        %v635 = vunpack.c.l.b16 %v599
        %v636 = vunpack.c.l.b16 %v600
        %v637 = vunpack.c.l.b16 %v601
        %v638 = vunpack.c.l.b16 %v602
        %v639 = vunpack.c.l.b16 %v603
        %v640 = vunpack.c.l.b16 %v604
        %v641 = vunpack.c.l.b16 %v605
        %v642 = vunpack.c.l.b16 %v606
        %v643 = vunpack.c.l.b16 %v607
        %v644 = vpack.c.b16 %v629, %v628
        %v645 = vpack.c.b16 %v631, %v630
        %v646 = vpack.c.b16 %v633, %v632
        %v647 = vpack.c.b16 %v635, %v634
        %v648 = vpack.c.b16 %v637, %v636
        %v649 = vpack.c.b16 %v639, %v638
        %v650 = vpack.c.b16 %v641, %v640
        %v651 = vpack.c.b16 %v643, %v642
        %660 = vmatpush.bf16.msra.mxu0 %v651
        %661 = vmatpush.bf16.msra.mxu0 %v650
        %662 = vmatpush.bf16.msra.mxu0 %v649
        %663 = vmatpush.bf16.msra.mxu0 %v648
        %664 = vmatpush.bf16.msra.mxu0 %v647
        %665 = vmatpush.bf16.msra.mxu0 %v646
        %666 = vmatpush.bf16.msra.mxu0 %v645
        %667 = vmatpush.bf16.msra.mxu0 %v644
        %668 = vmatmul.bf16.gmra.mxu0 %v591
        %v669 = vpop.f32.mrf.mxu0
        %v670 = vadd.f32 %v610, %v669
        %v671 = vpop.f32.mrf.mxu0
        %672 = vdwg.mxu0
        %673 = vst [vmem:[%s362] sm:$0xff] %v670
        %s674 = sand.u32 %s209, 1
        %s675 = scalar_lea.sflag [#allocation5], %s674
        %s676 = sand.u32 %s209, 1
        %s677 = smul.addr %s676, 8
        %s678 = scalar_lea.vmem [#allocation9], %s677
        // Predicated region
        $region65: #{tpu_custom_call.1} parent=47 // pred_check
          %p679 = pneg %p219
        $region66: #{tpu_custom_call.1} parent=47 // pred_check_branch
          %681 = sbr.rel (%p679) target = $region68
        $region67: #{tpu_custom_call.1} parent=47 // pred_region
          %683 = vsyncadd %s675, 0
          %s684 = sadd.s32 %s30, %s29
          %s685 = smul.addr %s684, 8
          %s686 = scalar_lea.hbm %s7, %s685
          %s688 = sshll.u32 %s678, 4
          %s689 = int_to_ptr.vmem [resolvable:$true] %s688
          %s690 = sshll.u32 %s686, 4
          %s691 = int_to_ptr.hbm [resolvable:$true] %s690
          %693 = dma.vmem_to_hbm [thread:$0]  %s689, 128, %s691, %s675
        $region68: #{tpu_custom_call.1} parent=47 // pred_fallthru
          _
      $region48: #{tpu_custom_call.1} parent=5 // pred_fallthru
        _
      %p694 = scmp.le.s32.totalorder 2, %s20
      // Predicated region
      $region69: #{tpu_custom_call.1} parent=5 // pred_check
        %p695 = pneg %p694
      $region70: #{tpu_custom_call.1} parent=5 // pred_check_branch
        %697 = sbr.rel (%p695) target = $region72
      $region71: #{tpu_custom_call.1} parent=5 // pred_region
        %s698 = ssub.s32 %s20, 2
        // Predicated region
        $region73: #{tpu_custom_call.1} parent=71 // pred_check
          %p699 = pneg %p225
        $region74: #{tpu_custom_call.1} parent=71 // pred_check_branch
          %701 = sbr.rel (%p699) target = $region76
        $region75: #{tpu_custom_call.1} parent=71 // pred_region
          %s702 = sand.u32 %s210, 1
          %s703 = scalar_lea.sflag [#allocation5], %s702
          %s704 = sand.u32 %s210, 1
          %s705 = smul.addr %s704, 8
          %s706 = scalar_lea.vmem [#allocation9], %s705
          %708 = dma.done %s703, 128
        $region76: #{tpu_custom_call.1} parent=71 // pred_fallthru
          _
      $region72: #{tpu_custom_call.1} parent=5 // pred_fallthru
        _
    $region6: #{tpu_custom_call.1} parent=1 // loop_footer
      %s24 = sadd.s32 1, %s20
    $region7: #{tpu_custom_call.1} parent=1 // loop_footer_branch
      %19 = sbr.rel target = $region3
    $region8: #{tpu_custom_call.1} parent=1 // loop_exit
      _
    %709 = vsyncpa [#allocation4], 1
    %s710 = scalar_lea.sflag [#allocation4], 1
    %711 = vsyncpa %s710, 1
    %712 = vsyncpa [#allocation7], 1
    %713 = vsyncpa [#allocation5], 1
    %s714 = scalar_lea.sflag [#allocation5], 1
    %715 = vsyncpa %s714, 1

</llo_original>
